<compile_context>
chip_gen: v7x
topology: tpu7x:2x2x1
jax: 0.10.0
libtpu: 0.0.40
codegen_flags: <defaults>
</compile_context>

<pallas_src>
import functools
import math

import jax
import jax.numpy as jnp
from jax.experimental import pallas as pl
from jax.experimental.pallas import tpu as pltpu


# ----------------------------- Pallas kernel --------------------------------

def _gnn_kernel(x_ref, a_ref, dis_ref, w0_ref, w1_ref, w2_ref, wc_ref, bc_ref,
                out_ref, *, n_real, n_pad, f_h):
    eps = 1e-5
    inv_n = 1.0 / n_real

    if n_pad != n_real:
        # Row mask for BN statistics, broadcast to feature width once (padded node rows
        # must not pollute the batch statistics). Compiled out when n_pad == n_real.
        row_mask = jnp.broadcast_to(
            (jax.lax.broadcasted_iota(jnp.int32, (n_pad, 1), 0)
             < n_real).astype(jnp.float32),
            (n_pad, f_h))
    else:
        row_mask = None

    def bn_relu_bf16(h):
        # BatchNorm1d (training mode, biased variance), gamma=1 / beta=0 per
        # init_weights. Two-pass stats (masked) for numerical robustness; stats and
        # normalization in f32, single cast to bf16 on the return (MXU operand dtype).
        hm = h if row_mask is None else h * row_mask
        mean = jnp.sum(hm, axis=0, keepdims=True) * inv_n
        d = h - mean
        dm = d if row_mask is None else d * row_mask
        var = jnp.sum(dm * dm, axis=0, keepdims=True) * inv_n
        hn = d * jax.lax.rsqrt(var + eps)
        return jnp.maximum(hn, 0.0).astype(jnp.bfloat16)

    x = x_ref[...]            # bf16 [n_pad, f_in]
    a = a_ref[...]            # bf16 [n_pad, n_pad], exact small-integer edge counts
    dis = dis_ref[...]        # f32  [n_pad, 1], D^{-1/2} (zero on padded rows)

    # --- encoder.node_lin : Linear (no bias, BN) + ReLU ---
    h = bn_relu_bf16(jnp.dot(x, w0_ref[...], preferred_element_type=jnp.float32))

    # --- encoder.Layer_1 / Layer_2 : GCNConv + BN + ReLU ---
    # A_norm @ hw == D^{-1/2} (A_counts @ (D^{-1/2} hw)); the two row scalings are done
    # in f32 on the VPU (free slot under the MXU), A_counts stays exact in bf16.
    for w_ref in (w1_ref, w2_ref):
        hw = jnp.dot(h, w_ref[...], preferred_element_type=jnp.float32)
        hw = (hw * dis).astype(jnp.bfloat16)
        agg = jnp.dot(a, hw, preferred_element_type=jnp.float32)
        h = bn_relu_bf16(agg * dis)

    # --- classifier : Linear (bias) + ReLU (GeneralLayer default has_act=True) ---
    o = jnp.dot(h, wc_ref[...], preferred_element_type=jnp.float32) + bc_ref[...]
    out_ref[...] = jnp.maximum(o, 0.0)


# ------------------------------- wrappers ------------------------------------

LANE = 128
SUB_BF16 = 16   # bf16 sublane-pack multiple; round to the MXU M tile when tiling large N


def _round_up(v, m):
    return ((v + m - 1) // m) * m


def _pad2(arr, rows, cols):
    return jnp.pad(arr, ((0, rows - arr.shape[0]), (0, cols - arr.shape[1])))


def prepare_gnn_params(w0, w1, w2, wc, bc):
    """One-time parameter prep: lane-pad to 128 and cast matmul operands to bf16."""
    dim_in, dim_inner = w0.shape
    dim_out = wc.shape[1]
    f_in = _round_up(dim_in, LANE)
    f_h = _round_up(dim_inner, LANE)
    f_out = _round_up(dim_out, LANE)
    return dict(
        w0=_pad2(w0, f_in, f_h).astype(jnp.bfloat16),
        w1=_pad2(w1, f_h, f_h).astype(jnp.bfloat16),
        w2=_pad2(w2, f_h, f_h).astype(jnp.bfloat16),
        wc=_pad2(wc, f_h, f_out).astype(jnp.bfloat16),
        bc=_pad2(bc.reshape(1, -1), 1, f_out).astype(jnp.float32),
        dim_out=dim_out,
    )


def prepare_graph(x, edge_index, num_nodes):
    """One-time per-graph prep: padded bf16 features, integer-count adjacency in bf16
    (add_remaining_self_loops + scatter-add duplicate edges), and f32 D^{-1/2}."""
    n, dim_in = x.shape
    n_pad = _round_up(max(n, SUB_BF16), SUB_BF16)
    f_in = _round_up(dim_in, LANE)

    src, dst = edge_index[0], edge_index[1]
    a = jnp.zeros((num_nodes, num_nodes), jnp.float32)
    a = a.at[dst, src].add(1.0)                        # sum duplicate messages src -> dst
    diag = jnp.diagonal(a)
    a = a + jnp.diag(jnp.where(diag == 0.0, 1.0, 0.0))  # add_remaining_self_loops
    deg = jnp.sum(a, axis=1)
    d_inv_sqrt = jnp.where(deg > 0, jax.lax.rsqrt(deg), 0.0)

    x_p = _pad2(x, n_pad, f_in).astype(jnp.bfloat16)
    # Small integer counts are exactly representable in bf16; normalization stays f32.
    a_p = _pad2(a, n_pad, n_pad).astype(jnp.bfloat16)
    dis_p = jnp.pad(d_inv_sqrt, (0, n_pad - num_nodes)).reshape(n_pad, 1)
    return x_p, a_p, dis_p, n


@functools.partial(jax.jit, static_argnames=("n_real", "dim_out"))
def gnn_forward_padded(x_p, a_p, dis_p, w0_p, w1_p, w2_p, wc_p, bc_p,
                       *, n_real, dim_out):
    n_pad = x_p.shape[0]
    f_h = w0_p.shape[1]
    f_out = wc_p.shape[1]

    inputs = (x_p, a_p, dis_p, w0_p, w1_p, w2_p, wc_p, bc_p)

    def full_spec(arr):
        nd = arr.ndim
        return pl.BlockSpec(arr.shape, lambda: (0,) * nd)

    kernel = functools.partial(_gnn_kernel, n_real=n_real, n_pad=n_pad, f_h=f_h)

    out = pl.pallas_call(
        kernel,
        out_shape=jax.ShapeDtypeStruct((n_pad, f_out), jnp.float32),
        grid=(),
        in_specs=[full_spec(arr) for arr in inputs],
        out_specs=pl.BlockSpec((n_pad, f_out), lambda: (0, 0)),
        # 32 MiB: vastly more than this whole-resident toy needs, and safely below the
        # v7x 64 MiB physical cap; raise per-generation only when graphs grow.
        compiler_params=pltpu.CompilerParams(vmem_limit_bytes=32 * 1024 * 1024),
    )(*inputs)

    return out[:n_real, :dim_out]


def gnn_forward(x, edge_index, params):
    x_p, a_p, dis_p, n = prepare_graph(x, edge_index, x.shape[0])
    return gnn_forward_padded(
        x_p, a_p, dis_p, params["w0"], params["w1"], params["w2"],
        params["wc"], params["bc"], n_real=n, dim_out=params["dim_out"])


# --------------------------- glue / parameter setup --------------------------

def xavier_uniform(key, fan_in, fan_out, gain):
    a = gain * math.sqrt(6.0 / (fan_in + fan_out))
    return jax.random.uniform(key, (fan_in, fan_out), jnp.float32, -a, a)


if __name__ == "__main__":
    # Small deterministic problem: N=32 nodes, dim_in=16, dim_inner=32, dim_out=8.
    N, DIM_IN, DIM_INNER, DIM_OUT, E = 32, 16, 32, 8, 64

    key = jax.random.PRNGKey(0)
    k_x, k_e, k_w0, k_w1, k_w2, k_wc = jax.random.split(key, 6)

    x = jax.random.normal(k_x, (N, DIM_IN), jnp.float32)
    edges = jax.random.randint(k_e, (2, E), 0, N, jnp.int32)
    # make edges bidirectional (typical for node-classification graphs)
    edge_index = jnp.concatenate([edges, edges[::-1]], axis=1)

    relu_gain = math.sqrt(2.0)  # nn.init.calculate_gain('relu')
    # nn.Linear weights -> xavier_uniform with relu gain (init_weights); biases zero.
    w0 = xavier_uniform(k_w0, DIM_IN, DIM_INNER, relu_gain)   # node_lin (bias=False: has_bn)
    wc = xavier_uniform(k_wc, DIM_INNER, DIM_OUT, relu_gain)  # classifier
    bc = jnp.zeros((1, DIM_OUT), jnp.float32)                 # classifier bias (zeroed)
    # GCNConv weights use PyG glorot (gain=1); init_weights does not touch them.
    w1 = xavier_uniform(k_w1, DIM_INNER, DIM_INNER, 1.0)
    w2 = xavier_uniform(k_w2, DIM_INNER, DIM_INNER, 1.0)

    # One-time prep (padding / bf16 casts hoisted out of the jitted forward path).
    params = prepare_gnn_params(w0, w1, w2, wc, bc)

    out = gnn_forward(x, edge_index, params)
    out = jax.block_until_ready(out)
    assert out.shape == (N, DIM_OUT) and out.dtype == jnp.float32
    assert bool(jnp.all(jnp.isfinite(out)))

    # TODO(synk): global_add_pool / heterogeneous-batch handling is config-gated off
    # (cfg.dataset.task='node', has_glob_pool=False) and therefore not emitted.
    print("KERNEL_OK")
</pallas_src>

<mosaic_0001>
module attributes {stable_mosaic.version = 11 : i64} {
  func.func @_gnn_kernel(%arg0: memref<32x128xbf16, #tpu.memory_space<vmem>>, %arg1: memref<32x32xbf16, #tpu.memory_space<vmem>>, %arg2: memref<32x1xf32, #tpu.memory_space<vmem>>, %arg3: memref<128x128xbf16, #tpu.memory_space<vmem>>, %arg4: memref<128x128xbf16, #tpu.memory_space<vmem>>, %arg5: memref<128x128xbf16, #tpu.memory_space<vmem>>, %arg6: memref<128x128xbf16, #tpu.memory_space<vmem>>, %arg7: memref<1x128xf32, #tpu.memory_space<vmem>>, %arg8: memref<32x128xf32, #tpu.memory_space<vmem>>) attributes {dimension_semantics = [], scalar_prefetch = 0 : i64, scratch_operands = 0 : i64, tpu.core_type = #tpu.core_type<tc>} {
    %c0 = arith.constant 0 : index
    %c0_0 = arith.constant 0 : index
    %0 = vector.load %arg0[%c0, %c0_0] : memref<32x128xbf16, #tpu.memory_space<vmem>>, vector<32x128xbf16>
    %c0_1 = arith.constant 0 : index
    %c0_2 = arith.constant 0 : index
    %1 = vector.load %arg1[%c0_1, %c0_2] : memref<32x32xbf16, #tpu.memory_space<vmem>>, vector<32x32xbf16>
    %c0_3 = arith.constant 0 : index
    %c0_4 = arith.constant 0 : index
    %2 = vector.load %arg2[%c0_3, %c0_4] : memref<32x1xf32, #tpu.memory_space<vmem>>, vector<32x1xf32>
    %c0_5 = arith.constant 0 : index
    %c0_6 = arith.constant 0 : index
    %3 = vector.load %arg3[%c0_5, %c0_6] : memref<128x128xbf16, #tpu.memory_space<vmem>>, vector<128x128xbf16>
    %cst = arith.constant dense<0.000000e+00> : vector<32x128xf32>
    %4 = tpu.matmul %0, %3, %cst {dimension_numbers = #tpu.dot_dimension_numbers<[1], [0], [0], [1], [0, 0, 1, 1], [], []>} : vector<32x128xbf16>, vector<128x128xbf16>, vector<32x128xf32> -> vector<32x128xf32>
    %cst_7 = arith.constant dense<0.000000e+00> : vector<128xf32>
    %5 = vector.multi_reduction <add>, %4, %cst_7 [0] : vector<32x128xf32> to vector<128xf32>
    %6 = vector.shape_cast %5 : vector<128xf32> to vector<1x128xf32>
    %cst_8 = arith.constant 3.125000e-02 : f32
    %7 = vector.broadcast %cst_8 : f32 to vector<1x128xf32>
    %8 = arith.mulf %6, %7 : vector<1x128xf32>
    %9 = vector.broadcast %8 : vector<1x128xf32> to vector<32x128xf32>
    %10 = arith.subf %4, %9 : vector<32x128xf32>
    %11 = arith.mulf %10, %10 : vector<32x128xf32>
    %cst_9 = arith.constant dense<0.000000e+00> : vector<128xf32>
    %12 = vector.multi_reduction <add>, %11, %cst_9 [0] : vector<32x128xf32> to vector<128xf32>
    %13 = vector.shape_cast %12 : vector<128xf32> to vector<1x128xf32>
    %cst_10 = arith.constant 3.125000e-02 : f32
    %14 = vector.broadcast %cst_10 : f32 to vector<1x128xf32>
    %15 = arith.mulf %13, %14 : vector<1x128xf32>
    %cst_11 = arith.constant 9.99999974E-6 : f32
    %16 = vector.broadcast %cst_11 : f32 to vector<1x128xf32>
    %17 = arith.addf %15, %16 : vector<1x128xf32>
    %18 = math.rsqrt %17 : vector<1x128xf32>
    %19 = vector.broadcast %18 : vector<1x128xf32> to vector<32x128xf32>
    %20 = arith.mulf %10, %19 : vector<32x128xf32>
    %cst_12 = arith.constant 0.000000e+00 : f32
    %21 = vector.broadcast %cst_12 : f32 to vector<32x128xf32>
    %22 = arith.maximumf %20, %21 : vector<32x128xf32>
    %23 = arith.truncf %22 : vector<32x128xf32> to vector<32x128xbf16>
    %c0_13 = arith.constant 0 : index
    %c0_14 = arith.constant 0 : index
    %24 = vector.load %arg4[%c0_13, %c0_14] : memref<128x128xbf16, #tpu.memory_space<vmem>>, vector<128x128xbf16>
    %cst_15 = arith.constant dense<0.000000e+00> : vector<32x128xf32>
    %25 = tpu.matmul %23, %24, %cst_15 {dimension_numbers = #tpu.dot_dimension_numbers<[1], [0], [0], [1], [0, 0, 1, 1], [], []>} : vector<32x128xbf16>, vector<128x128xbf16>, vector<32x128xf32> -> vector<32x128xf32>
    %26 = vector.broadcast %2 : vector<32x1xf32> to vector<32x128xf32>
    %27 = arith.mulf %25, %26 : vector<32x128xf32>
    %28 = arith.truncf %27 : vector<32x128xf32> to vector<32x128xbf16>
    %cst_16 = arith.constant dense<0.000000e+00> : vector<32x128xf32>
    %29 = tpu.matmul %1, %28, %cst_16 {dimension_numbers = #tpu.dot_dimension_numbers<[1], [0], [0], [1], [0, 0, 1, 1], [], []>} : vector<32x32xbf16>, vector<32x128xbf16>, vector<32x128xf32> -> vector<32x128xf32>
    %30 = vector.broadcast %2 : vector<32x1xf32> to vector<32x128xf32>
    %31 = arith.mulf %29, %30 : vector<32x128xf32>
    %cst_17 = arith.constant dense<0.000000e+00> : vector<128xf32>
    %32 = vector.multi_reduction <add>, %31, %cst_17 [0] : vector<32x128xf32> to vector<128xf32>
    %33 = vector.shape_cast %32 : vector<128xf32> to vector<1x128xf32>
    %cst_18 = arith.constant 3.125000e-02 : f32
    %34 = vector.broadcast %cst_18 : f32 to vector<1x128xf32>
    %35 = arith.mulf %33, %34 : vector<1x128xf32>
    %36 = vector.broadcast %35 : vector<1x128xf32> to vector<32x128xf32>
    %37 = arith.subf %31, %36 : vector<32x128xf32>
    %38 = arith.mulf %37, %37 : vector<32x128xf32>
    %cst_19 = arith.constant dense<0.000000e+00> : vector<128xf32>
    %39 = vector.multi_reduction <add>, %38, %cst_19 [0] : vector<32x128xf32> to vector<128xf32>
    %40 = vector.shape_cast %39 : vector<128xf32> to vector<1x128xf32>
    %cst_20 = arith.constant 3.125000e-02 : f32
    %41 = vector.broadcast %cst_20 : f32 to vector<1x128xf32>
    %42 = arith.mulf %40, %41 : vector<1x128xf32>
    %cst_21 = arith.constant 9.99999974E-6 : f32
    %43 = vector.broadcast %cst_21 : f32 to vector<1x128xf32>
    %44 = arith.addf %42, %43 : vector<1x128xf32>
    %45 = math.rsqrt %44 : vector<1x128xf32>
    %46 = vector.broadcast %45 : vector<1x128xf32> to vector<32x128xf32>
    %47 = arith.mulf %37, %46 : vector<32x128xf32>
    %cst_22 = arith.constant 0.000000e+00 : f32
    %48 = vector.broadcast %cst_22 : f32 to vector<32x128xf32>
    %49 = arith.maximumf %47, %48 : vector<32x128xf32>
    %50 = arith.truncf %49 : vector<32x128xf32> to vector<32x128xbf16>
    %c0_23 = arith.constant 0 : index
    %c0_24 = arith.constant 0 : index
    %51 = vector.load %arg5[%c0_23, %c0_24] : memref<128x128xbf16, #tpu.memory_space<vmem>>, vector<128x128xbf16>
    %cst_25 = arith.constant dense<0.000000e+00> : vector<32x128xf32>
    %52 = tpu.matmul %50, %51, %cst_25 {dimension_numbers = #tpu.dot_dimension_numbers<[1], [0], [0], [1], [0, 0, 1, 1], [], []>} : vector<32x128xbf16>, vector<128x128xbf16>, vector<32x128xf32> -> vector<32x128xf32>
    %53 = vector.broadcast %2 : vector<32x1xf32> to vector<32x128xf32>
    %54 = arith.mulf %52, %53 : vector<32x128xf32>
    %55 = arith.truncf %54 : vector<32x128xf32> to vector<32x128xbf16>
    %cst_26 = arith.constant dense<0.000000e+00> : vector<32x128xf32>
    %56 = tpu.matmul %1, %55, %cst_26 {dimension_numbers = #tpu.dot_dimension_numbers<[1], [0], [0], [1], [0, 0, 1, 1], [], []>} : vector<32x32xbf16>, vector<32x128xbf16>, vector<32x128xf32> -> vector<32x128xf32>
    %57 = vector.broadcast %2 : vector<32x1xf32> to vector<32x128xf32>
    %58 = arith.mulf %56, %57 : vector<32x128xf32>
    %cst_27 = arith.constant dense<0.000000e+00> : vector<128xf32>
    %59 = vector.multi_reduction <add>, %58, %cst_27 [0] : vector<32x128xf32> to vector<128xf32>
    %60 = vector.shape_cast %59 : vector<128xf32> to vector<1x128xf32>
    %cst_28 = arith.constant 3.125000e-02 : f32
    %61 = vector.broadcast %cst_28 : f32 to vector<1x128xf32>
    %62 = arith.mulf %60, %61 : vector<1x128xf32>
    %63 = vector.broadcast %62 : vector<1x128xf32> to vector<32x128xf32>
    %64 = arith.subf %58, %63 : vector<32x128xf32>
    %65 = arith.mulf %64, %64 : vector<32x128xf32>
    %cst_29 = arith.constant dense<0.000000e+00> : vector<128xf32>
    %66 = vector.multi_reduction <add>, %65, %cst_29 [0] : vector<32x128xf32> to vector<128xf32>
    %67 = vector.shape_cast %66 : vector<128xf32> to vector<1x128xf32>
    %cst_30 = arith.constant 3.125000e-02 : f32
    %68 = vector.broadcast %cst_30 : f32 to vector<1x128xf32>
    %69 = arith.mulf %67, %68 : vector<1x128xf32>
    %cst_31 = arith.constant 9.99999974E-6 : f32
    %70 = vector.broadcast %cst_31 : f32 to vector<1x128xf32>
    %71 = arith.addf %69, %70 : vector<1x128xf32>
    %72 = math.rsqrt %71 : vector<1x128xf32>
    %73 = vector.broadcast %72 : vector<1x128xf32> to vector<32x128xf32>
    %74 = arith.mulf %64, %73 : vector<32x128xf32>
    %cst_32 = arith.constant 0.000000e+00 : f32
    %75 = vector.broadcast %cst_32 : f32 to vector<32x128xf32>
    %76 = arith.maximumf %74, %75 : vector<32x128xf32>
    %77 = arith.truncf %76 : vector<32x128xf32> to vector<32x128xbf16>
    %c0_33 = arith.constant 0 : index
    %c0_34 = arith.constant 0 : index
    %78 = vector.load %arg6[%c0_33, %c0_34] : memref<128x128xbf16, #tpu.memory_space<vmem>>, vector<128x128xbf16>
    %cst_35 = arith.constant dense<0.000000e+00> : vector<32x128xf32>
    %79 = tpu.matmul %77, %78, %cst_35 {dimension_numbers = #tpu.dot_dimension_numbers<[1], [0], [0], [1], [0, 0, 1, 1], [], []>} : vector<32x128xbf16>, vector<128x128xbf16>, vector<32x128xf32> -> vector<32x128xf32>
    %c0_36 = arith.constant 0 : index
    %c0_37 = arith.constant 0 : index
    %80 = vector.load %arg7[%c0_36, %c0_37] : memref<1x128xf32, #tpu.memory_space<vmem>>, vector<1x128xf32>
    %81 = vector.broadcast %80 : vector<1x128xf32> to vector<32x128xf32>
    %82 = arith.addf %79, %81 : vector<32x128xf32>
    %cst_38 = arith.constant 0.000000e+00 : f32
    %83 = vector.broadcast %cst_38 : f32 to vector<32x128xf32>
    %84 = arith.maximumf %82, %83 : vector<32x128xf32>
    %c0_39 = arith.constant 0 : index
    %c0_40 = arith.constant 0 : index
    %85 = vector.load %arg8[%c0_39, %c0_40] : memref<32x128xf32, #tpu.memory_space<vmem>>, vector<32x128xf32>
    tpu.vector_store %arg8[%c0_39, %c0_40], %84 {strides = array<i32>} : memref<32x128xf32, #tpu.memory_space<vmem>>, vector<32x128xf32>,
    return
  }
}

</mosaic_0001>

<llo_original>
// kernel: gnn_forward_padded.1
$region0: #{gnn_forward_padded.1}
  #allocation0 [shape = 'u32[]', space=smem, size = 0x4, offset = 0x4, fixed_abs, tag = 'smem constant byte address 0x4 - core index']
  #allocation1 [shape = 'u32[144,128]{1,0:T(1,128)}', space=vmem, size = 0x12000, scoped, tag = 'internal scratch']
  %s0 = inlined_call_operand.vmem [shape: bf16[32,128], index: 0, kind: input, shape index: {}]
  %s1 = inlined_call_operand.vmem [shape: bf16[32,32], index: 1, kind: input, shape index: {}]
  %s2 = inlined_call_operand.vmem [shape: f32[32,1], index: 2, kind: input, shape index: {}]
  %s3 = inlined_call_operand.hbm [shape: bf16[128,128], index: 3, kind: input, shape index: {}]
  %s4 = inlined_call_operand.hbm [shape: bf16[128,128], index: 4, kind: input, shape index: {}]
  %s5 = inlined_call_operand.hbm [shape: bf16[128,128], index: 5, kind: input, shape index: {}]
  %s6 = inlined_call_operand.hbm [shape: bf16[128,128], index: 6, kind: input, shape index: {}]
  %s7 = inlined_call_operand.vmem [shape: f32[1,128], index: 7, kind: input, shape index: {}]
  %s8 = inlined_call_operand.vmem [shape: f32[32,128], index: 8, kind: output, shape index: {}]
  %s9 = sld [smem:[#allocation0]]
  $region58: #{gnn_forward_padded.1} parent=0
    _
  %s11 = ssub.s32 1, %s9
  %s12 = scalar_select 0, %s11, %s9
  $region1: #{gnn_forward_padded.1} parent=0
    #allocation2 [shape = 'u8[32768]{0}', space=vmem, size = 0x8000, scoped, tag = 'input window, operand 3, single buffered']
    #allocation3 [shape = 's32[1]{0}', space=sflag, size = 0x4, scoped, tag = 'scoped memory for gnn_forward_padded.1']
    #allocation4 [shape = 'u8[32768]{0}', space=vmem, size = 0x8000, scoped, tag = 'input window, operand 4, single buffered']
    #allocation5 [shape = 's32[1]{0}', space=sflag, size = 0x4, scoped, tag = 'scoped memory for gnn_forward_padded.1']
    #allocation6 [shape = 'u8[32768]{0}', space=vmem, size = 0x8000, scoped, tag = 'input window, operand 5, single buffered']
    #allocation7 [shape = 'u8[32768]{0}', space=vmem, size = 0x8000, scoped, tag = 'input window, operand 6, single buffered']
    #allocation8 [shape = 's32[1]{0}', space=sflag, size = 0x4, scoped, tag = 'scoped memory for gnn_forward_padded.1']
    %13 = vsyncpa [#allocation3], 0
    %14 = vsyncpa [#allocation5], 0
    %15 = vsyncpa [#allocation8], 0
    // Predicated region
    $region2: #{gnn_forward_padded.1} parent=1 // pred_check
      _
    $region3: #{gnn_forward_padded.1} parent=1 // pred_check_branch
      %17 = sbr.rel (0) target = $region5
    $region4: #{gnn_forward_padded.1} parent=1 // pred_region
      _
    $region5: #{gnn_forward_padded.1} parent=1 // pred_fallthru
      _
    // Predicated region
    $region6: #{gnn_forward_padded.1} parent=1 // pred_check
      _
    $region7: #{gnn_forward_padded.1} parent=1 // pred_check_branch
      %19 = sbr.rel (0) target = $region9
    $region8: #{gnn_forward_padded.1} parent=1 // pred_region
      _
    $region9: #{gnn_forward_padded.1} parent=1 // pred_fallthru
      _
    // Predicated region
    $region10: #{gnn_forward_padded.1} parent=1 // pred_check
      _
    $region11: #{gnn_forward_padded.1} parent=1 // pred_check_branch
      %21 = sbr.rel (0) target = $region13
    $region12: #{gnn_forward_padded.1} parent=1 // pred_region
      _
    $region13: #{gnn_forward_padded.1} parent=1 // pred_fallthru
      _
    // Predicated region
    $region14: #{gnn_forward_padded.1} parent=1 // pred_check
      _
    $region15: #{gnn_forward_padded.1} parent=1 // pred_check_branch
      %23 = sbr.rel (0) target = $region17
    $region16: #{gnn_forward_padded.1} parent=1 // pred_region
      %s25 = ssub.s32 1024, 1024
      %26 = vsyncadd [#allocation3], %s25
      %s27 = sshll.u32 [#allocation2], 4
      %s28 = int_to_ptr.vmem [resolvable:$true] %s27
      %33 = dma.hbm_to_vmem [thread:$0]  %s3, 1024, %s28, [#allocation3], 64, 64, 4
    $region17: #{gnn_forward_padded.1} parent=1 // pred_fallthru
      _
    // Predicated region
    $region18: #{gnn_forward_padded.1} parent=1 // pred_check
      _
    $region19: #{gnn_forward_padded.1} parent=1 // pred_check_branch
      %35 = sbr.rel (0) target = $region21
    $region20: #{gnn_forward_padded.1} parent=1 // pred_region
      %s37 = ssub.s32 1024, 1024
      %38 = vsyncadd [#allocation5], %s37
      %s39 = sshll.u32 [#allocation4], 4
      %s40 = int_to_ptr.vmem [resolvable:$true] %s39
      %45 = dma.hbm_to_vmem [thread:$0]  %s4, 1024, %s40, [#allocation5], 64, 64, 4
    $region21: #{gnn_forward_padded.1} parent=1 // pred_fallthru
      _
    // Predicated region
    $region22: #{gnn_forward_padded.1} parent=1 // pred_check
      _
    $region23: #{gnn_forward_padded.1} parent=1 // pred_check_branch
      %47 = sbr.rel (0) target = $region25
    $region24: #{gnn_forward_padded.1} parent=1 // pred_region
      %s49 = ssub.s32 1024, 1024
      %50 = vsyncadd [#allocation5], %s49
      %s51 = sshll.u32 [#allocation6], 4
      %s52 = int_to_ptr.vmem [resolvable:$true] %s51
      %57 = dma.hbm_to_vmem [thread:$0]  %s5, 1024, %s52, [#allocation5], 64, 64, 4
    $region25: #{gnn_forward_padded.1} parent=1 // pred_fallthru
      _
    // Predicated region
    $region26: #{gnn_forward_padded.1} parent=1 // pred_check
      _
    $region27: #{gnn_forward_padded.1} parent=1 // pred_check_branch
      %59 = sbr.rel (0) target = $region29
    $region28: #{gnn_forward_padded.1} parent=1 // pred_region
      %s61 = ssub.s32 1024, 1024
      %62 = vsyncadd [#allocation8], %s61
      %s63 = sshll.u32 [#allocation7], 4
      %s64 = int_to_ptr.vmem [resolvable:$true] %s63
      %69 = dma.hbm_to_vmem [thread:$0]  %s6, 1024, %s64, [#allocation8], 64, 64, 4
    $region29: #{gnn_forward_padded.1} parent=1 // pred_fallthru
      _
    // Predicated region
    $region30: #{gnn_forward_padded.1} parent=1 // pred_check
      _
    $region31: #{gnn_forward_padded.1} parent=1 // pred_check_branch
      %71 = sbr.rel (0) target = $region33
    $region32: #{gnn_forward_padded.1} parent=1 // pred_region
      _
    $region33: #{gnn_forward_padded.1} parent=1 // pred_fallthru
      _
    // Predicated region
    $region34: #{gnn_forward_padded.1} parent=1 // pred_check
      _
    $region35: #{gnn_forward_padded.1} parent=1 // pred_check_branch
      %73 = sbr.rel (0) target = $region37
    $region36: #{gnn_forward_padded.1} parent=1 // pred_region
      %74 = dma.done [#allocation3], 1024
    $region37: #{gnn_forward_padded.1} parent=1 // pred_fallthru
      _
    // Predicated region
    $region38: #{gnn_forward_padded.1} parent=1 // pred_check
      _
    $region39: #{gnn_forward_padded.1} parent=1 // pred_check_branch
      %76 = sbr.rel (0) target = $region41
    $region40: #{gnn_forward_padded.1} parent=1 // pred_region
      %77 = dma.done [#allocation5], 1024
    $region41: #{gnn_forward_padded.1} parent=1 // pred_fallthru
      _
    // Predicated region
    $region42: #{gnn_forward_padded.1} parent=1 // pred_check
      _
    $region43: #{gnn_forward_padded.1} parent=1 // pred_check_branch
      %79 = sbr.rel (0) target = $region45
    $region44: #{gnn_forward_padded.1} parent=1 // pred_region
      %80 = dma.done [#allocation5], 1024
    $region45: #{gnn_forward_padded.1} parent=1 // pred_fallthru
      _
    // Predicated region
    $region46: #{gnn_forward_padded.1} parent=1 // pred_check
      _
    $region47: #{gnn_forward_padded.1} parent=1 // pred_check_branch
      %82 = sbr.rel (0) target = $region49
    $region48: #{gnn_forward_padded.1} parent=1 // pred_region
      %83 = dma.done [#allocation8], 1024
    $region49: #{gnn_forward_padded.1} parent=1 // pred_fallthru
      _
    %v85 = vld [vmem:[%s0] sm:$0xf]
    %v86 = vld [vmem:[%s0 + $0x4] sm:$0xf]
    %v87 = vld [vmem:[%s0 + $0x8] sm:$0xf]
    %v88 = vld [vmem:[%s0 + $0xc] sm:$0xf]
    %v89 = vld [vmem:[%s1] sm:$0xf]
    %v90 = vld [vmem:[%s1 + $0x4] sm:$0xf]
    %v91 = vld [vmem:[%s1 + $0x8] sm:$0xf]
    %v92 = vld [vmem:[%s1 + $0xc] sm:$0xf]
    %v93 = vld [vmem:[%s2] sm:$0xff]
    %v94 = vld [vmem:[%s2 + $0x8] sm:$0xff]
    %v95 = vld [vmem:[%s2 + $0x10] sm:$0xff]
    %v96 = vld [vmem:[%s2 + $0x18] sm:$0xff]
    %v97 = vld [vmem:[#allocation2] sm:$0xf]
    %v98 = vld [vmem:[#allocation2 + $0x4] sm:$0xf]
    %v99 = vld [vmem:[#allocation2 + $0x8] sm:$0xf]
    %v100 = vld [vmem:[#allocation2 + $0xc] sm:$0xf]
    %v101 = vld [vmem:[#allocation2 + $0x10] sm:$0xf]
    %v102 = vld [vmem:[#allocation2 + $0x14] sm:$0xf]
    %v103 = vld [vmem:[#allocation2 + $0x18] sm:$0xf]
    %v104 = vld [vmem:[#allocation2 + $0x1c] sm:$0xf]
    %v105 = vld [vmem:[#allocation2 + $0x20] sm:$0xf]
    %v106 = vld [vmem:[#allocation2 + $0x24] sm:$0xf]
    %v107 = vld [vmem:[#allocation2 + $0x28] sm:$0xf]
    %v108 = vld [vmem:[#allocation2 + $0x2c] sm:$0xf]
    %v109 = vld [vmem:[#allocation2 + $0x30] sm:$0xf]
    %v110 = vld [vmem:[#allocation2 + $0x34] sm:$0xf]
    %v111 = vld [vmem:[#allocation2 + $0x38] sm:$0xf]
    %v112 = vld [vmem:[#allocation2 + $0x3c] sm:$0xf]
    %v117 = vunpack.c.l.b16 %v85
    %v118 = vunpack.c.l.b16 %v86
    %v119 = vunpack.c.l.b16 %v87
    %v120 = vunpack.c.l.b16 %v88
    %v121 = vpack.c.b16 %v118, %v117
    %v122 = vpack.c.b16 %v120, %v119
    %v141 = vunpack.c.l.b16 %v97
    %v142 = vunpack.c.l.b16 %v98
    %v143 = vunpack.c.l.b16 %v99
    %v144 = vunpack.c.l.b16 %v100
    %v145 = vunpack.c.l.b16 %v101
    %v146 = vunpack.c.l.b16 %v102
    %v147 = vunpack.c.l.b16 %v103
    %v148 = vunpack.c.l.b16 %v104
    %v149 = vunpack.c.l.b16 %v105
    %v150 = vunpack.c.l.b16 %v106
    %v151 = vunpack.c.l.b16 %v107
    %v152 = vunpack.c.l.b16 %v108
    %v153 = vunpack.c.l.b16 %v109
    %v154 = vunpack.c.l.b16 %v110
    %v155 = vunpack.c.l.b16 %v111
    %v156 = vunpack.c.l.b16 %v112
    %v157 = vpack.c.b16 %v142, %v141
    %v158 = vpack.c.b16 %v144, %v143
    %v159 = vpack.c.b16 %v146, %v145
    %v160 = vpack.c.b16 %v148, %v147
    %v161 = vpack.c.b16 %v150, %v149
    %v162 = vpack.c.b16 %v152, %v151
    %v163 = vpack.c.b16 %v154, %v153
    %v164 = vpack.c.b16 %v156, %v155
    %173 = vmatprep.subr.bf16.mxu0 0
    %174 = vmatpush1.bf16.msra.mxu0 %v157
    %175 = vmatprep.subr.bf16.mxu0 0
    %176 = vmatpush1.bf16.msra.mxu0 %v158
    %177 = vmatprep.subr.bf16.mxu0 0
    %178 = vmatpush1.bf16.msra.mxu0 %v159
    %179 = vmatprep.subr.bf16.mxu0 0
    %180 = vmatpush1.bf16.msra.mxu0 %v160
    %181 = vmatprep.subr.bf16.mxu0 0
    %182 = vmatpush1.bf16.msra.mxu0 %v161
    %183 = vmatprep.subr.bf16.mxu0 0
    %184 = vmatpush1.bf16.msra.mxu0 %v162
    %185 = vmatprep.subr.bf16.mxu0 0
    %186 = vmatpush1.bf16.msra.mxu0 %v163
    %187 = vmatprep.subr.bf16.mxu0 0
    %188 = vmatpush1.bf16.msra.mxu0 %v164
    %189 = vmatprep.subr.bf16.mxu0 0
    %190 = vmatpush1.bf16.msra.mxu0 0
    %191 = vmatprep.subr.bf16.mxu0 0
    %192 = vmatpush1.bf16.msra.mxu0 0
    %193 = vmatprep.subr.bf16.mxu0 0
    %194 = vmatpush1.bf16.msra.mxu0 0
    %195 = vmatprep.subr.bf16.mxu0 0
    %196 = vmatpush1.bf16.msra.mxu0 0
    %197 = vmatprep.subr.bf16.mxu0 0
    %198 = vmatpush1.bf16.msra.mxu0 0
    %199 = vmatprep.subr.bf16.mxu0 0
    %200 = vmatpush1.bf16.msra.mxu0 0
    %201 = vmatprep.subr.bf16.mxu0 0
    %202 = vmatpush1.bf16.msra.mxu0 0
    %203 = vmatprep.subr.bf16.mxu0 0
    %204 = vmatpush1.bf16.msra.mxu0 0
    %205 = vmatprep.mubr.bf16.mxu0 0
    %206 = vmatmul.mubr.bf16.gmra.mrb[0].mxu0 %v121
    %v207 = vpop.f32.mrb[0].mxu0
    %v208 = vadd.f32 0.0, %v207
    %v209 = vpop.f32.mrb[0].mxu0
    %v210 = vpop.f32.mrb[0].mxu0
    %v211 = vadd.f32 0.0, %v210
    %v212 = vpop.f32.mrb[0].mxu0
    %213 = vmatprep.mubr.bf16.mxu0 0
    %214 = vmatmul.mubr.bf16.gmra.mrb[0].mxu0 %v122
    %v215 = vpop.f32.mrb[0].mxu0
    %v216 = vadd.f32 0.0, %v215
    %v217 = vpop.f32.mrb[0].mxu0
    %v218 = vpop.f32.mrb[0].mxu0
    %v219 = vadd.f32 0.0, %v218
    %v220 = vpop.f32.mrb[0].mxu0
    %221 = vdwg.mxu0
    %v222 = vadd.f32 %v208, %v211
    %v223 = vadd.f32 %v222, %v216
    %v224 = vadd.f32 %v223, %v219
    %v225 = vrot.slane %v224, 4
    %v226 = vadd.f32 %v224, %v225
    %v227 = vrot.slane %v226, 2
    %v228 = vadd.f32 %v226, %v227
    %v229 = vrot.slane %v228, 1
    %v230 = vadd.f32 %v228, %v229
    %v231 = vmul.f32 %v230, 0.03125
    %v232 = vsub.f32 %v208, %v231
    %v233 = vsub.f32 %v211, %v231
    %v234 = vsub.f32 %v216, %v231
    %v235 = vsub.f32 %v219, %v231
    %v236 = vmul.f32 %v232, %v232
    %v237 = vmul.f32 %v233, %v233
    %v238 = vmul.f32 %v234, %v234
    %v239 = vmul.f32 %v235, %v235
    %v240 = vadd.f32 %v236, %v237
    %v241 = vadd.f32 %v240, %v238
    %v242 = vadd.f32 %v241, %v239
    %v243 = vrot.slane %v242, 4
    %v244 = vadd.f32 %v242, %v243
    %v245 = vrot.slane %v244, 2
    %v246 = vadd.f32 %v244, %v245
    %v247 = vrot.slane %v246, 1
    %v248 = vadd.f32 %v246, %v247
    %v249 = vmul.f32 %v248, 0.03125
    %v250 = vadd.f32 %v249, 1e-05
    %v251 = vrsqrt.pop %v250
    %v252 = vmul.f32 %v232, %v251
    %v253 = vmul.f32 %v233, %v251
    %v254 = vmul.f32 %v234, %v251
    %v255 = vmul.f32 %v235, %v251
    %v256 = vmax.f32 %v252, 0.0
    %v257 = vmax.f32 %v253, 0.0
    %v258 = vmax.f32 %v254, 0.0
    %v259 = vmax.f32 %v255, 0.0
    %v260 = vpack.c.bf16 %v257, %v256
    %v261 = vpack.c.bf16 %v259, %v258
    %v262 = vld [vmem:[#allocation4] sm:$0xf]
    %v263 = vld [vmem:[#allocation4 + $0x4] sm:$0xf]
    %v264 = vld [vmem:[#allocation4 + $0x8] sm:$0xf]
    %v265 = vld [vmem:[#allocation4 + $0xc] sm:$0xf]
    %v266 = vld [vmem:[#allocation4 + $0x10] sm:$0xf]
    %v267 = vld [vmem:[#allocation4 + $0x14] sm:$0xf]
    %v268 = vld [vmem:[#allocation4 + $0x18] sm:$0xf]
    %v269 = vld [vmem:[#allocation4 + $0x1c] sm:$0xf]
    %v270 = vld [vmem:[#allocation4 + $0x20] sm:$0xf]
    %v271 = vld [vmem:[#allocation4 + $0x24] sm:$0xf]
    %v272 = vld [vmem:[#allocation4 + $0x28] sm:$0xf]
    %v273 = vld [vmem:[#allocation4 + $0x2c] sm:$0xf]
    %v274 = vld [vmem:[#allocation4 + $0x30] sm:$0xf]
    %v275 = vld [vmem:[#allocation4 + $0x34] sm:$0xf]
    %v276 = vld [vmem:[#allocation4 + $0x38] sm:$0xf]
    %v277 = vld [vmem:[#allocation4 + $0x3c] sm:$0xf]
    %v294 = vunpack.c.l.b16 %v262
    %v295 = vunpack.c.l.b16 %v263
    %v296 = vunpack.c.l.b16 %v264
    %v297 = vunpack.c.l.b16 %v265
    %v298 = vunpack.c.l.b16 %v266
    %v299 = vunpack.c.l.b16 %v267
    %v300 = vunpack.c.l.b16 %v268
    %v301 = vunpack.c.l.b16 %v269
    %v302 = vunpack.c.l.b16 %v270
    %v303 = vunpack.c.l.b16 %v271
    %v304 = vunpack.c.l.b16 %v272
    %v305 = vunpack.c.l.b16 %v273
    %v306 = vunpack.c.l.b16 %v274
    %v307 = vunpack.c.l.b16 %v275
    %v308 = vunpack.c.l.b16 %v276
    %v309 = vunpack.c.l.b16 %v277
    %v310 = vpack.c.b16 %v295, %v294
    %v311 = vpack.c.b16 %v297, %v296
    %v312 = vpack.c.b16 %v299, %v298
    %v313 = vpack.c.b16 %v301, %v300
    %v314 = vpack.c.b16 %v303, %v302
    %v315 = vpack.c.b16 %v305, %v304
    %v316 = vpack.c.b16 %v307, %v306
    %v317 = vpack.c.b16 %v309, %v308
    %326 = vmatprep.subr.bf16.mxu0 0
    %327 = vmatpush1.bf16.msra.mxu0 %v310
    %328 = vmatprep.subr.bf16.mxu0 0
    %329 = vmatpush1.bf16.msra.mxu0 %v311
    %330 = vmatprep.subr.bf16.mxu0 0
    %331 = vmatpush1.bf16.msra.mxu0 %v312
    %332 = vmatprep.subr.bf16.mxu0 0
    %333 = vmatpush1.bf16.msra.mxu0 %v313
    %334 = vmatprep.subr.bf16.mxu0 0
    %335 = vmatpush1.bf16.msra.mxu0 %v314
    %336 = vmatprep.subr.bf16.mxu0 0
    %337 = vmatpush1.bf16.msra.mxu0 %v315
    %338 = vmatprep.subr.bf16.mxu0 0
    %339 = vmatpush1.bf16.msra.mxu0 %v316
    %340 = vmatprep.subr.bf16.mxu0 0
    %341 = vmatpush1.bf16.msra.mxu0 %v317
    %342 = vmatprep.subr.bf16.mxu0 0
    %343 = vmatpush1.bf16.msra.mxu0 0
    %344 = vmatprep.subr.bf16.mxu0 0
    %345 = vmatpush1.bf16.msra.mxu0 0
    %346 = vmatprep.subr.bf16.mxu0 0
    %347 = vmatpush1.bf16.msra.mxu0 0
    %348 = vmatprep.subr.bf16.mxu0 0
    %349 = vmatpush1.bf16.msra.mxu0 0
    %350 = vmatprep.subr.bf16.mxu0 0
    %351 = vmatpush1.bf16.msra.mxu0 0
    %352 = vmatprep.subr.bf16.mxu0 0
    %353 = vmatpush1.bf16.msra.mxu0 0
    %354 = vmatprep.subr.bf16.mxu0 0
    %355 = vmatpush1.bf16.msra.mxu0 0
    %356 = vmatprep.subr.bf16.mxu0 0
    %357 = vmatpush1.bf16.msra.mxu0 0
    %358 = vmatprep.mubr.bf16.mxu0 0
    %359 = vmatmul.mubr.bf16.gmra.mrb[0].mxu0 %v260
    %v360 = vpop.f32.mrb[0].mxu0
    %v361 = vadd.f32 0.0, %v360
    %v362 = vpop.f32.mrb[0].mxu0
    %v363 = vpop.f32.mrb[0].mxu0
    %v364 = vadd.f32 0.0, %v363
    %v365 = vpop.f32.mrb[0].mxu0
    %366 = vmatprep.mubr.bf16.mxu0 0
    %367 = vmatmul.mubr.bf16.gmra.mrb[0].mxu0 %v261
    %v368 = vpop.f32.mrb[0].mxu0
    %v369 = vadd.f32 0.0, %v368
    %v370 = vpop.f32.mrb[0].mxu0
    %v371 = vpop.f32.mrb[0].mxu0
    %v372 = vadd.f32 0.0, %v371
    %v373 = vpop.f32.mrb[0].mxu0
    %374 = vdwg.mxu0
    %376 = vset.pattern.permute.xlu0 0
    %377 = vperm.xlu0 %376, %v93
    %v378 = vpop.permute.xlu0 %377
    %381 = vset.pattern.permute.xlu0 0
    %382 = vperm.xlu0 %381, %v94
    %v383 = vpop.permute.xlu0 %382
    %386 = vset.pattern.permute.xlu0 0
    %387 = vperm.xlu0 %386, %v95
    %v388 = vpop.permute.xlu0 %387
    %391 = vset.pattern.permute.xlu0 0
    %392 = vperm.xlu0 %391, %v96
    %v393 = vpop.permute.xlu0 %392
    %v395 = vmul.f32 %v361, %v378
    %v396 = vmul.f32 %v364, %v383
    %v397 = vmul.f32 %v369, %v388
    %v398 = vmul.f32 %v372, %v393
    %v399 = vpack.c.bf16 %v396, %v395
    %v400 = vpack.c.bf16 %v398, %v397
    %v405 = vunpack.c.l.b16 %v89
    %v406 = vunpack.c.l.b16 %v90
    %v407 = vunpack.c.l.b16 %v91
    %v408 = vunpack.c.l.b16 %v92
    %v409 = vpack.c.b16 %v406, %v405
    %v410 = vpack.c.b16 %v408, %v407
    %vm411 = vcmask 261120
    %v413 = vsel %vm411, %v409, 0
    %v416 = vsel %vm411, %v410, 0
    %418 = vmatprep.subr.bf16.mxu0 0
    %419 = vmatpush1.bf16.msra.mxu0 %v399
    %420 = vmatprep.subr.bf16.mxu0 0
    %421 = vmatpush1.bf16.msra.mxu0 %v400
    %422 = vmatprep.subr.bf16.mxu0 0
    %423 = vmatpush1.bf16.msra.mxu0 0
    %424 = vmatprep.subr.bf16.mxu0 0
    %425 = vmatpush1.bf16.msra.mxu0 0
    %426 = vmatprep.subr.bf16.mxu0 0
    %427 = vmatpush1.bf16.msra.mxu0 0
    %428 = vmatprep.subr.bf16.mxu0 0
    %429 = vmatpush1.bf16.msra.mxu0 0
    %430 = vmatprep.subr.bf16.mxu0 0
    %431 = vmatpush1.bf16.msra.mxu0 0
    %432 = vmatprep.subr.bf16.mxu0 0
    %433 = vmatpush1.bf16.msra.mxu0 0
    %434 = vmatprep.subr.bf16.mxu0 0
    %435 = vmatpush1.bf16.msra.mxu0 0
    %436 = vmatprep.subr.bf16.mxu0 0
    %437 = vmatpush1.bf16.msra.mxu0 0
    %438 = vmatprep.subr.bf16.mxu0 0
    %439 = vmatpush1.bf16.msra.mxu0 0
    %440 = vmatprep.subr.bf16.mxu0 0
    %441 = vmatpush1.bf16.msra.mxu0 0
    %442 = vmatprep.subr.bf16.mxu0 0
    %443 = vmatpush1.bf16.msra.mxu0 0
    %444 = vmatprep.subr.bf16.mxu0 0
    %445 = vmatpush1.bf16.msra.mxu0 0
    %446 = vmatprep.subr.bf16.mxu0 0
    %447 = vmatpush1.bf16.msra.mxu0 0
    %448 = vmatprep.subr.bf16.mxu0 0
    %449 = vmatpush1.bf16.msra.mxu0 0
    %450 = vmatprep.mubr.bf16.mxu0 0
    %451 = vmatmul.mubr.bf16.gmra.mrb[0].mxu0 %v413
    %v452 = vpop.f32.mrb[0].mxu0
    %v453 = vadd.f32 0.0, %v452
    %v454 = vpop.f32.mrb[0].mxu0
    %v455 = vpop.f32.mrb[0].mxu0
    %v456 = vadd.f32 0.0, %v455
    %v457 = vpop.f32.mrb[0].mxu0
    %458 = vmatprep.mubr.bf16.mxu0 0
    %459 = vmatmul.mubr.bf16.gmra.mrb[0].mxu0 %v416
    %v460 = vpop.f32.mrb[0].mxu0
    %v461 = vadd.f32 0.0, %v460
    %v462 = vpop.f32.mrb[0].mxu0
    %v463 = vpop.f32.mrb[0].mxu0
    %v464 = vadd.f32 0.0, %v463
    %v465 = vpop.f32.mrb[0].mxu0
    %466 = vdwg.mxu0
    %v467 = vmul.f32 %v453, %v378
    %v468 = vmul.f32 %v456, %v383
    %v469 = vmul.f32 %v461, %v388
    %v470 = vmul.f32 %v464, %v393
    %v471 = vadd.f32 %v467, %v468
    %v472 = vadd.f32 %v471, %v469
    %v473 = vadd.f32 %v472, %v470
    %v474 = vrot.slane %v473, 4
    %v475 = vadd.f32 %v473, %v474
    %v476 = vrot.slane %v475, 2
    %v477 = vadd.f32 %v475, %v476
    %v478 = vrot.slane %v477, 1
    %v479 = vadd.f32 %v477, %v478
    %v480 = vmul.f32 %v479, 0.03125
    %v481 = vsub.f32 %v467, %v480
    %v482 = vsub.f32 %v468, %v480
    %v483 = vsub.f32 %v469, %v480
    %v484 = vsub.f32 %v470, %v480
    %v485 = vmul.f32 %v481, %v481
    %v486 = vmul.f32 %v482, %v482
    %v487 = vmul.f32 %v483, %v483
    %v488 = vmul.f32 %v484, %v484
    %v489 = vadd.f32 %v485, %v486
    %v490 = vadd.f32 %v489, %v487
    %v491 = vadd.f32 %v490, %v488
    %v492 = vrot.slane %v491, 4
    %v493 = vadd.f32 %v491, %v492
    %v494 = vrot.slane %v493, 2
    %v495 = vadd.f32 %v493, %v494
    %v496 = vrot.slane %v495, 1
    %v497 = vadd.f32 %v495, %v496
    %v498 = vmul.f32 %v497, 0.03125
    %v499 = vadd.f32 %v498, 1e-05
    %v500 = vrsqrt.pop %v499
    %v501 = vmul.f32 %v481, %v500
    %v502 = vmul.f32 %v482, %v500
    %v503 = vmul.f32 %v483, %v500
    %v504 = vmul.f32 %v484, %v500
    %v505 = vmax.f32 %v501, 0.0
    %v506 = vmax.f32 %v502, 0.0
    %v507 = vmax.f32 %v503, 0.0
    %v508 = vmax.f32 %v504, 0.0
    %v509 = vpack.c.bf16 %v506, %v505
    %v510 = vpack.c.bf16 %v508, %v507
    %v511 = vld [vmem:[#allocation6] sm:$0xf]
    %v512 = vld [vmem:[#allocation6 + $0x4] sm:$0xf]
    %v513 = vld [vmem:[#allocation6 + $0x8] sm:$0xf]
    %v514 = vld [vmem:[#allocation6 + $0xc] sm:$0xf]
    %v515 = vld [vmem:[#allocation6 + $0x10] sm:$0xf]
    %v516 = vld [vmem:[#allocation6 + $0x14] sm:$0xf]
    %v517 = vld [vmem:[#allocation6 + $0x18] sm:$0xf]
    %v518 = vld [vmem:[#allocation6 + $0x1c] sm:$0xf]
    %v519 = vld [vmem:[#allocation6 + $0x20] sm:$0xf]
    %v520 = vld [vmem:[#allocation6 + $0x24] sm:$0xf]
    %v521 = vld [vmem:[#allocation6 + $0x28] sm:$0xf]
    %v522 = vld [vmem:[#allocation6 + $0x2c] sm:$0xf]
    %v523 = vld [vmem:[#allocation6 + $0x30] sm:$0xf]
    %v524 = vld [vmem:[#allocation6 + $0x34] sm:$0xf]
    %v525 = vld [vmem:[#allocation6 + $0x38] sm:$0xf]
    %v526 = vld [vmem:[#allocation6 + $0x3c] sm:$0xf]
    %v543 = vunpack.c.l.b16 %v511
    %v544 = vunpack.c.l.b16 %v512
    %v545 = vunpack.c.l.b16 %v513
    %v546 = vunpack.c.l.b16 %v514
    %v547 = vunpack.c.l.b16 %v515
    %v548 = vunpack.c.l.b16 %v516
    %v549 = vunpack.c.l.b16 %v517
    %v550 = vunpack.c.l.b16 %v518
    %v551 = vunpack.c.l.b16 %v519
    %v552 = vunpack.c.l.b16 %v520
    %v553 = vunpack.c.l.b16 %v521
    %v554 = vunpack.c.l.b16 %v522
    %v555 = vunpack.c.l.b16 %v523
    %v556 = vunpack.c.l.b16 %v524
    %v557 = vunpack.c.l.b16 %v525
    %v558 = vunpack.c.l.b16 %v526
    %v559 = vpack.c.b16 %v544, %v543
    %v560 = vpack.c.b16 %v546, %v545
    %v561 = vpack.c.b16 %v548, %v547
    %v562 = vpack.c.b16 %v550, %v549
    %v563 = vpack.c.b16 %v552, %v551
    %v564 = vpack.c.b16 %v554, %v553
    %v565 = vpack.c.b16 %v556, %v555
    %v566 = vpack.c.b16 %v558, %v557
    %575 = vmatprep.subr.bf16.mxu0 0
    %576 = vmatpush1.bf16.msra.mxu0 %v559
    %577 = vmatprep.subr.bf16.mxu0 0
    %578 = vmatpush1.bf16.msra.mxu0 %v560
    %579 = vmatprep.subr.bf16.mxu0 0
    %580 = vmatpush1.bf16.msra.mxu0 %v561
    %581 = vmatprep.subr.bf16.mxu0 0
    %582 = vmatpush1.bf16.msra.mxu0 %v562
    %583 = vmatprep.subr.bf16.mxu0 0
    %584 = vmatpush1.bf16.msra.mxu0 %v563
    %585 = vmatprep.subr.bf16.mxu0 0
    %586 = vmatpush1.bf16.msra.mxu0 %v564
    %587 = vmatprep.subr.bf16.mxu0 0
    %588 = vmatpush1.bf16.msra.mxu0 %v565
    %589 = vmatprep.subr.bf16.mxu0 0
    %590 = vmatpush1.bf16.msra.mxu0 %v566
    %591 = vmatprep.subr.bf16.mxu0 0
    %592 = vmatpush1.bf16.msra.mxu0 0
    %593 = vmatprep.subr.bf16.mxu0 0
    %594 = vmatpush1.bf16.msra.mxu0 0
    %595 = vmatprep.subr.bf16.mxu0 0
    %596 = vmatpush1.bf16.msra.mxu0 0
    %597 = vmatprep.subr.bf16.mxu0 0
    %598 = vmatpush1.bf16.msra.mxu0 0
    %599 = vmatprep.subr.bf16.mxu0 0
    %600 = vmatpush1.bf16.msra.mxu0 0
    %601 = vmatprep.subr.bf16.mxu0 0
    %602 = vmatpush1.bf16.msra.mxu0 0
    %603 = vmatprep.subr.bf16.mxu0 0
    %604 = vmatpush1.bf16.msra.mxu0 0
    %605 = vmatprep.subr.bf16.mxu0 0
    %606 = vmatpush1.bf16.msra.mxu0 0
    %607 = vmatprep.mubr.bf16.mxu0 0
    %608 = vmatmul.mubr.bf16.gmra.mrb[0].mxu0 %v509
    %v609 = vpop.f32.mrb[0].mxu0
    %v610 = vadd.f32 0.0, %v609
    %v611 = vpop.f32.mrb[0].mxu0
    %v612 = vpop.f32.mrb[0].mxu0
    %v613 = vadd.f32 0.0, %v612
    %v614 = vpop.f32.mrb[0].mxu0
    %615 = vmatprep.mubr.bf16.mxu0 0
    %616 = vmatmul.mubr.bf16.gmra.mrb[0].mxu0 %v510
    %v617 = vpop.f32.mrb[0].mxu0
    %v618 = vadd.f32 0.0, %v617
    %v619 = vpop.f32.mrb[0].mxu0
    %v620 = vpop.f32.mrb[0].mxu0
    %v621 = vadd.f32 0.0, %v620
    %v622 = vpop.f32.mrb[0].mxu0
    %623 = vdwg.mxu0
    %v624 = vmul.f32 %v610, %v378
    %v625 = vmul.f32 %v613, %v383
    %v626 = vmul.f32 %v618, %v388
    %v627 = vmul.f32 %v621, %v393
    %v628 = vpack.c.bf16 %v625, %v624
    %v629 = vpack.c.bf16 %v627, %v626
    %630 = vmatprep.subr.bf16.mxu0 0
    %631 = vmatpush1.bf16.msra.mxu0 %v628
    %632 = vmatprep.subr.bf16.mxu0 0
    %633 = vmatpush1.bf16.msra.mxu0 %v629
    %634 = vmatprep.subr.bf16.mxu0 0
    %635 = vmatpush1.bf16.msra.mxu0 0
    %636 = vmatprep.subr.bf16.mxu0 0
    %637 = vmatpush1.bf16.msra.mxu0 0
    %638 = vmatprep.subr.bf16.mxu0 0
    %639 = vmatpush1.bf16.msra.mxu0 0
    %640 = vmatprep.subr.bf16.mxu0 0
    %641 = vmatpush1.bf16.msra.mxu0 0
    %642 = vmatprep.subr.bf16.mxu0 0
    %643 = vmatpush1.bf16.msra.mxu0 0
    %644 = vmatprep.subr.bf16.mxu0 0
    %645 = vmatpush1.bf16.msra.mxu0 0
    %646 = vmatprep.subr.bf16.mxu0 0
    %647 = vmatpush1.bf16.msra.mxu0 0
    %648 = vmatprep.subr.bf16.mxu0 0
    %649 = vmatpush1.bf16.msra.mxu0 0
    %650 = vmatprep.subr.bf16.mxu0 0
    %651 = vmatpush1.bf16.msra.mxu0 0
    %652 = vmatprep.subr.bf16.mxu0 0
    %653 = vmatpush1.bf16.msra.mxu0 0
    %654 = vmatprep.subr.bf16.mxu0 0
    %655 = vmatpush1.bf16.msra.mxu0 0
    %656 = vmatprep.subr.bf16.mxu0 0
    %657 = vmatpush1.bf16.msra.mxu0 0
    %658 = vmatprep.subr.bf16.mxu0 0
    %659 = vmatpush1.bf16.msra.mxu0 0
    %660 = vmatprep.subr.bf16.mxu0 0
    %661 = vmatpush1.bf16.msra.mxu0 0
    %662 = vmatprep.mubr.bf16.mxu0 0
    %663 = vmatmul.mubr.bf16.gmra.mrb[0].mxu0 %v413
    %v664 = vpop.f32.mrb[0].mxu0
    %v665 = vadd.f32 0.0, %v664
    %v666 = vpop.f32.mrb[0].mxu0
    %v667 = vpop.f32.mrb[0].mxu0
    %v668 = vadd.f32 0.0, %v667
    %v669 = vpop.f32.mrb[0].mxu0
    %670 = vmatprep.mubr.bf16.mxu0 0
    %671 = vmatmul.mubr.bf16.gmra.mrb[0].mxu0 %v416
    %v672 = vpop.f32.mrb[0].mxu0
    %v673 = vadd.f32 0.0, %v672
    %v674 = vpop.f32.mrb[0].mxu0
    %v675 = vpop.f32.mrb[0].mxu0
    %v676 = vadd.f32 0.0, %v675
    %v677 = vpop.f32.mrb[0].mxu0
    %678 = vdwg.mxu0
    %v679 = vmul.f32 %v665, %v378
    %v680 = vmul.f32 %v668, %v383
    %v681 = vmul.f32 %v673, %v388
    %v682 = vmul.f32 %v676, %v393
    %v683 = vadd.f32 %v679, %v680
    %v684 = vadd.f32 %v683, %v681
    %v685 = vadd.f32 %v684, %v682
    %v686 = vrot.slane %v685, 4
    %v687 = vadd.f32 %v685, %v686
    %v688 = vrot.slane %v687, 2
    %v689 = vadd.f32 %v687, %v688
    %v690 = vrot.slane %v689, 1
    %v691 = vadd.f32 %v689, %v690
    %v692 = vmul.f32 %v691, 0.03125
    %v693 = vsub.f32 %v679, %v692
    %v694 = vsub.f32 %v680, %v692
    %v695 = vsub.f32 %v681, %v692
    %v696 = vsub.f32 %v682, %v692
    %v697 = vmul.f32 %v693, %v693
    %v698 = vmul.f32 %v694, %v694
    %v699 = vmul.f32 %v695, %v695
    %v700 = vmul.f32 %v696, %v696
    %v701 = vadd.f32 %v697, %v698
    %v702 = vadd.f32 %v701, %v699
    %v703 = vadd.f32 %v702, %v700
    %v704 = vrot.slane %v703, 4
    %v705 = vadd.f32 %v703, %v704
    %v706 = vrot.slane %v705, 2
    %v707 = vadd.f32 %v705, %v706
    %v708 = vrot.slane %v707, 1
    %v709 = vadd.f32 %v707, %v708
    %v710 = vmul.f32 %v709, 0.03125
    %v711 = vadd.f32 %v710, 1e-05
    %v712 = vrsqrt.pop %v711
    %v713 = vmul.f32 %v693, %v712
    %v714 = vmul.f32 %v694, %v712
    %v715 = vmul.f32 %v695, %v712
    %v716 = vmul.f32 %v696, %v712
    %v717 = vmax.f32 %v713, 0.0
    %v718 = vmax.f32 %v714, 0.0
    %v719 = vmax.f32 %v715, 0.0
    %v720 = vmax.f32 %v716, 0.0
    %v721 = vpack.c.bf16 %v718, %v717
    %v722 = vpack.c.bf16 %v720, %v719
    %v723 = vld [vmem:[#allocation7] sm:$0xf]
    %v724 = vld [vmem:[#allocation7 + $0x4] sm:$0xf]
    %v725 = vld [vmem:[#allocation7 + $0x8] sm:$0xf]
    %v726 = vld [vmem:[#allocation7 + $0xc] sm:$0xf]
    %v727 = vld [vmem:[#allocation7 + $0x10] sm:$0xf]
    %v728 = vld [vmem:[#allocation7 + $0x14] sm:$0xf]
    %v729 = vld [vmem:[#allocation7 + $0x18] sm:$0xf]
    %v730 = vld [vmem:[#allocation7 + $0x1c] sm:$0xf]
    %v731 = vld [vmem:[#allocation7 + $0x20] sm:$0xf]
    %v732 = vld [vmem:[#allocation7 + $0x24] sm:$0xf]
    %v733 = vld [vmem:[#allocation7 + $0x28] sm:$0xf]
    %v734 = vld [vmem:[#allocation7 + $0x2c] sm:$0xf]
    %v735 = vld [vmem:[#allocation7 + $0x30] sm:$0xf]
    %v736 = vld [vmem:[#allocation7 + $0x34] sm:$0xf]
    %v737 = vld [vmem:[#allocation7 + $0x38] sm:$0xf]
    %v738 = vld [vmem:[#allocation7 + $0x3c] sm:$0xf]
    %v739 = vld [vmem:[%s7] sm:$0x1]
    %v741 = vlaneseq
    %v742 = vshrl.u32 %v741, 7
    %v743 = vsub.s32 0, %v742
    %v744 = vrot.slane %v739, %v743
    %v762 = vunpack.c.l.b16 %v723
    %v763 = vunpack.c.l.b16 %v724
    %v764 = vunpack.c.l.b16 %v725
    %v765 = vunpack.c.l.b16 %v726
    %v766 = vunpack.c.l.b16 %v727
    %v767 = vunpack.c.l.b16 %v728
    %v768 = vunpack.c.l.b16 %v729
    %v769 = vunpack.c.l.b16 %v730
    %v770 = vunpack.c.l.b16 %v731
    %v771 = vunpack.c.l.b16 %v732
    %v772 = vunpack.c.l.b16 %v733
    %v773 = vunpack.c.l.b16 %v734
    %v774 = vunpack.c.l.b16 %v735
    %v775 = vunpack.c.l.b16 %v736
    %v776 = vunpack.c.l.b16 %v737
    %v777 = vunpack.c.l.b16 %v738
    %v778 = vpack.c.b16 %v763, %v762
    %v779 = vpack.c.b16 %v765, %v764
    %v780 = vpack.c.b16 %v767, %v766
    %v781 = vpack.c.b16 %v769, %v768
    %v782 = vpack.c.b16 %v771, %v770
    %v783 = vpack.c.b16 %v773, %v772
    %v784 = vpack.c.b16 %v775, %v774
    %v785 = vpack.c.b16 %v777, %v776
    %794 = vmatprep.subr.bf16.mxu0 0
    %795 = vmatpush1.bf16.msra.mxu0 %v778
    %796 = vmatprep.subr.bf16.mxu0 0
    %797 = vmatpush1.bf16.msra.mxu0 %v779
    %798 = vmatprep.subr.bf16.mxu0 0
    %799 = vmatpush1.bf16.msra.mxu0 %v780
    %800 = vmatprep.subr.bf16.mxu0 0
    %801 = vmatpush1.bf16.msra.mxu0 %v781
    %802 = vmatprep.subr.bf16.mxu0 0
    %803 = vmatpush1.bf16.msra.mxu0 %v782
    %804 = vmatprep.subr.bf16.mxu0 0
    %805 = vmatpush1.bf16.msra.mxu0 %v783
    %806 = vmatprep.subr.bf16.mxu0 0
    %807 = vmatpush1.bf16.msra.mxu0 %v784
    %808 = vmatprep.subr.bf16.mxu0 0
    %809 = vmatpush1.bf16.msra.mxu0 %v785
    %810 = vmatprep.subr.bf16.mxu0 0
    %811 = vmatpush1.bf16.msra.mxu0 0
    %812 = vmatprep.subr.bf16.mxu0 0
    %813 = vmatpush1.bf16.msra.mxu0 0
    %814 = vmatprep.subr.bf16.mxu0 0
    %815 = vmatpush1.bf16.msra.mxu0 0
    %816 = vmatprep.subr.bf16.mxu0 0
    %817 = vmatpush1.bf16.msra.mxu0 0
    %818 = vmatprep.subr.bf16.mxu0 0
    %819 = vmatpush1.bf16.msra.mxu0 0
    %820 = vmatprep.subr.bf16.mxu0 0
    %821 = vmatpush1.bf16.msra.mxu0 0
    %822 = vmatprep.subr.bf16.mxu0 0
    %823 = vmatpush1.bf16.msra.mxu0 0
    %824 = vmatprep.subr.bf16.mxu0 0
    %825 = vmatpush1.bf16.msra.mxu0 0
    %826 = vmatprep.mubr.bf16.mxu0 0
    %827 = vmatmul.mubr.bf16.gmra.mrb[0].mxu0 %v721
    %v828 = vpop.f32.mrb[0].mxu0
    %v829 = vadd.f32 %v744, %v828
    %v830 = vpop.f32.mrb[0].mxu0
    %v831 = vpop.f32.mrb[0].mxu0
    %v832 = vadd.f32 %v744, %v831
    %v833 = vpop.f32.mrb[0].mxu0
    %834 = vmatprep.mubr.bf16.mxu0 0
    %835 = vmatmul.mubr.bf16.gmra.mrb[0].mxu0 %v722
    %v836 = vpop.f32.mrb[0].mxu0
    %v837 = vadd.f32 %v744, %v836
    %v838 = vpop.f32.mrb[0].mxu0
    %v839 = vpop.f32.mrb[0].mxu0
    %v840 = vadd.f32 %v744, %v839
    %v841 = vpop.f32.mrb[0].mxu0
    %842 = vdwg.mxu0
    %v843 = vmax.f32 %v829, 0.0
    %v844 = vmax.f32 %v832, 0.0
    %v845 = vmax.f32 %v837, 0.0
    %v846 = vmax.f32 %v840, 0.0
    %847 = vst [vmem:[%s8] sm:$0xff] %v843
    %848 = vst [vmem:[%s8 + $0x8] sm:$0xff] %v844
    %849 = vst [vmem:[%s8 + $0x10] sm:$0xff] %v845
    %850 = vst [vmem:[%s8 + $0x18] sm:$0xff] %v846
    // Predicated region
    $region50: #{gnn_forward_padded.1} parent=1 // pred_check
      _
    $region51: #{gnn_forward_padded.1} parent=1 // pred_check_branch
      %852 = sbr.rel (0) target = $region53
    $region52: #{gnn_forward_padded.1} parent=1 // pred_region
      _
    $region53: #{gnn_forward_padded.1} parent=1 // pred_fallthru
      _
    // Predicated region
    $region54: #{gnn_forward_padded.1} parent=1 // pred_check
      _
    $region55: #{gnn_forward_padded.1} parent=1 // pred_check_branch
      %854 = sbr.rel (0) target = $region57
    $region56: #{gnn_forward_padded.1} parent=1 // pred_region
      _
    $region57: #{gnn_forward_padded.1} parent=1 // pred_fallthru
      _
    %855 = vsyncpa [#allocation3], 1
    %856 = vsyncpa [#allocation5], 1
    %857 = vsyncpa [#allocation8], 1

</llo_original>
